<compile_context>
chip_gen: v7x
topology: tpu7x:2x2x1
jax: 0.10.0
libtpu: 0.0.40
codegen_flags: <defaults>
</compile_context>

<pallas_src>
from functools import partial

import jax
import jax.numpy as jnp
from jax.experimental import pallas as pl
from jax.experimental.pallas import tpu as pltpu

LANE = 128
TM_CAP = 1024


def _round_up(x, m):
    return (x + m - 1) // m * m


def _choose_tiling(batch, tm_cap=TM_CAP):
    """Pick (TM, B_pad). Keeps padding waste small and, for large batches,
    at least 2 grid steps (v7x has 2 TensorCores on the 'parallel' axis)."""
    b_pad = _round_up(max(batch, 1), 16)
    if b_pad <= 512:
        return b_pad, b_pad                     # single small tile
    n_tiles = max(2, -(-b_pad // tm_cap))       # >= 2 tiles for v7x megacore
    tm = _round_up(-(-b_pad // n_tiles), 16)
    b_pad = _round_up(b_pad, tm)
    return tm, b_pad


# ----------------------------- Pallas kernel -------------------------------

def soft_q_kernel(x_ref, w1_ref, w23_ref, bvec_ref, o_ref, xs_ref):
    # x_ref:   (TM, F)            f32   batch tile at natural feature width
    # w1_ref:  (IN_PAD, H_PAD)    bf16  resident
    # w23_ref: (2, H_PAD, H_PAD)  bf16  resident (w2 | w3)
    # bvec_ref:(8, H_PAD)         f32   rows: b1, b2, b3, w4_row, zeros...
    # o_ref:   (TM, 1)            f32   compact q column
    # xs_ref:  (TM, IN_PAD)       f32   scratch: lane-padded input
    f = x_ref.shape[1]

    # Zero-pad feature lanes F -> IN_PAD inside VMEM (re-zeroed each tile so
    # it is correct regardless of how the parallel grid is split over cores),
    # then cast to bf16 for the MXU.
    xs_ref[...] = jnp.zeros_like(xs_ref)
    xs_ref[:, :f] = x_ref[...]
    xb = xs_ref[...].astype(jnp.bfloat16)

    b1 = bvec_ref[0:1, :]
    b2 = bvec_ref[1:2, :]
    b3 = bvec_ref[2:3, :]
    w4 = bvec_ref[3:4, :]

    h = jnp.dot(xb, w1_ref[...], preferred_element_type=jnp.float32) + b1
    h = jnp.maximum(h, 0.0)
    h = jnp.dot(h.astype(jnp.bfloat16), w23_ref[0],
                preferred_element_type=jnp.float32) + b2
    h = jnp.maximum(h, 0.0)
    h = jnp.dot(h.astype(jnp.bfloat16), w23_ref[1],
                preferred_element_type=jnp.float32) + b3
    h = jnp.maximum(h, 0.0)

    # Final [hidden, 1] layer: VPU multiply + lane reduction; compact (TM, 1)
    # store (the tiny output removes the HBM-writeback inflation; final bias
    # b4 is added in the wrapper).
    o_ref[...] = jnp.sum(h * w4, axis=-1, keepdims=True)


def soft_q_mlp(x, packed_params):
    """x: [B, num_inputs + num_actions] f32 -> q: [B, 1] f32."""
    w1p, w23p, bvec, b4 = packed_params
    B, F = x.shape
    IN_PAD, H_PAD = w1p.shape

    TM, B_pad = _choose_tiling(B)

    if B_pad != B:
        x_in = jnp.zeros((B_pad, F), x.dtype).at[:B, :].set(x)
    else:
        x_in = x

    out = pl.pallas_call(
        soft_q_kernel,
        out_shape=jax.ShapeDtypeStruct((B_pad, 1), jnp.float32),
        grid=(B_pad // TM,),
        in_specs=[
            pl.BlockSpec((TM, F), lambda i: (i, 0)),              # x (tiled)
            pl.BlockSpec((IN_PAD, H_PAD), lambda i: (0, 0)),      # w1
            pl.BlockSpec(w23p.shape, lambda i: (0, 0, 0)),        # w2 | w3
            pl.BlockSpec(bvec.shape, lambda i: (0, 0)),           # b1..b3, w4
        ],
        out_specs=pl.BlockSpec((TM, 1), lambda i: (i, 0)),
        scratch_shapes=[pltpu.VMEM((TM, IN_PAD), jnp.float32)],
        compiler_params=pltpu.CompilerParams(
            dimension_semantics=("parallel",)),
    )(x_in, w1p, w23p, bvec)

    return out[:B] + b4


# --------------------------- Embedding layer (glue) -------------------------
# TODO(synk): per-column embedding gather + concat is data-dependent glue and
# stays in plain JAX (fused by jax.jit around the pallas_call).

def embedding_lookup(cat_idx, emb_tables):
    """cat_idx: [B, n_cat] int32; emb_tables: list of [vocab_c, emb_dim_c]."""
    outs = [emb_tables[c][cat_idx[:, c]] for c in range(len(emb_tables))]
    return jnp.concatenate(outs, axis=1)


# ------------------------------ Full forward --------------------------------

@partial(jax.jit, static_argnames="n_cat")
def soft_q_forward(state, action, emb_tables, packed_params, n_cat):
    cat_tensor = state[:, :n_cat].astype(jnp.int32)            # .long()
    num_tensor = state[:, n_cat:]
    embedding = embedding_lookup(cat_tensor, emb_tables)
    x = jnp.concatenate([embedding, num_tensor, action], axis=1)
    return soft_q_mlp(x.astype(jnp.float32), packed_params)


# ------------------------- Deterministic param init -------------------------

def init_params(key, num_inputs, num_actions, hidden_size, init_w=0.003):
    """Mimic PyTorch nn.Linear defaults (uniform +/- 1/sqrt(fan_in)) and the
    explicit +/- init_w init for the last layer.  Weights stored (in, out)."""
    ks = jax.random.split(key, 8)

    def linear(kw, kb, fan_in, fan_out, bound):
        w = jax.random.uniform(kw, (fan_in, fan_out), jnp.float32, -bound, bound)
        b = jax.random.uniform(kb, (1, fan_out), jnp.float32, -bound, bound)
        return w, b

    in1 = num_inputs + num_actions
    w1, b1 = linear(ks[0], ks[1], in1, hidden_size, 1.0 / jnp.sqrt(in1))
    w2, b2 = linear(ks[2], ks[3], hidden_size, hidden_size,
                    1.0 / jnp.sqrt(hidden_size))
    w3, b3 = linear(ks[4], ks[5], hidden_size, hidden_size,
                    1.0 / jnp.sqrt(hidden_size))
    w4, b4 = linear(ks[6], ks[7], hidden_size, 1, init_w)
    return (w1, b1, w2, b2, w3, b3, w4, b4)


def pack_params(params, lane=LANE):
    """Pad feature axes to lane multiples and pack operands for the kernel:
    w1 -> (IN_PAD, H_PAD) bf16; {w2, w3} -> (2, H_PAD, H_PAD) bf16;
    {b1, b2, b3, w4_row} -> (8, H_PAD) f32; b4 stays a (1, 1) f32 scalar
    added in the wrapper."""
    w1, b1, w2, b2, w3, b3, w4, b4 = params
    in1, hidden = w1.shape
    in_pad = _round_up(in1, lane)
    h_pad = _round_up(hidden, lane)

    def pad2(a, r, c):
        out = jnp.zeros((r, c), a.dtype)
        return out.at[:a.shape[0], :a.shape[1]].set(a)

    w1p = pad2(w1, in_pad, h_pad).astype(jnp.bfloat16)
    w23p = jnp.stack([pad2(w2, h_pad, h_pad),
                      pad2(w3, h_pad, h_pad)]).astype(jnp.bfloat16)

    bvec = jnp.zeros((8, h_pad), jnp.float32)
    bvec = bvec.at[0, :hidden].set(b1[0])
    bvec = bvec.at[1, :hidden].set(b2[0])
    bvec = bvec.at[2, :hidden].set(b3[0])
    bvec = bvec.at[3, :hidden].set(w4[:, 0])

    b4s = b4.reshape(1, 1)
    return (w1p, w23p, bvec, b4s)


# ---------------------------------- main -------------------------------------

if __name__ == "__main__":
    key = jax.random.PRNGKey(0)
    k_emb, k_par, k_cat, k_num, k_act = jax.random.split(key, 5)

    # Synthetic embedding-layer config (cat_cols + per-column vocab/emb dim).
    cat_vocab_sizes = [5, 7, 4]        # len(cat_cols) = 3
    emb_dims = [4, 4, 4]               # total embedding dim = 12
    n_cat = len(cat_vocab_sizes)
    num_numeric = 6
    num_inputs = sum(emb_dims) + num_numeric   # 18 (post-embedding state dim)
    num_actions = 4
    hidden_size = 32
    batch = 8

    # Embedding tables: nn.Embedding default init ~ N(0, 1).
    emb_keys = jax.random.split(k_emb, n_cat)
    emb_tables = [
        jax.random.normal(emb_keys[c], (cat_vocab_sizes[c], emb_dims[c]),
                          jnp.float32)
        for c in range(n_cat)
    ]

    params = init_params(k_par, num_inputs, num_actions, hidden_size)
    packed_params = pack_params(params)

    # Raw state = [categorical indices (stored as floats) | numeric features].
    cat_part = jax.random.randint(
        k_cat, (batch, n_cat), 0, min(cat_vocab_sizes)).astype(jnp.float32)
    num_part = jax.random.normal(k_num, (batch, num_numeric), jnp.float32)
    state = jnp.concatenate([cat_part, num_part], axis=1)       # [8, 9]
    action = jax.random.normal(k_act, (batch, num_actions), jnp.float32)

    q = soft_q_forward(state, action, emb_tables, packed_params, n_cat=n_cat)
    jax.block_until_ready(q)
    assert q.shape == (batch, 1) and q.dtype == jnp.float32

    # --- Reference checks -----------------------------------------------
    cat_idx = state[:, :n_cat].astype(jnp.int32)
    x_full = jnp.concatenate(
        [embedding_lookup(cat_idx, emb_tables), state[:, n_cat:], action],
        axis=1).astype(jnp.float32)

    # (1) bf16-matched reference of the in-kernel MLP (same dtypes / ops).
    w1p, w23p, bvec, b4s = packed_params
    xb = jnp.zeros((batch, w1p.shape[0]), jnp.float32)
    xb = xb.at[:, :x_full.shape[1]].set(x_full).astype(jnp.bfloat16)
    h = jnp.maximum(jnp.dot(xb, w1p,
                            preferred_element_type=jnp.float32) + bvec[0:1], 0.0)
    h = jnp.maximum(jnp.dot(h.astype(jnp.bfloat16), w23p[0],
                            preferred_element_type=jnp.float32) + bvec[1:2], 0.0)
    h = jnp.maximum(jnp.dot(h.astype(jnp.bfloat16), w23p[1],
                            preferred_element_type=jnp.float32) + bvec[2:3], 0.0)
    q_bf16_ref = jnp.sum(h * bvec[3:4], axis=-1, keepdims=True) + b4s
    assert jnp.allclose(q, q_bf16_ref, atol=2e-3, rtol=2e-3)

    # (2) full-f32 reference (PyTorch semantics), loose tolerance for bf16.
    w1, b1, w2, b2, w3, b3, w4, b4 = params
    hf = jnp.maximum(x_full @ w1 + b1, 0.0)
    hf = jnp.maximum(hf @ w2 + b2, 0.0)
    hf = jnp.maximum(hf @ w3 + b3, 0.0)
    q_f32_ref = hf @ w4 + b4
    assert jnp.allclose(q, q_f32_ref, atol=5e-2, rtol=5e-2)

    print("KERNEL_OK")
</pallas_src>

<mosaic_0001>
module attributes {stable_mosaic.version = 11 : i64} {
  func.func @soft_q_kernel(%arg0: i32, %arg1: memref<16x22xf32, #tpu.memory_space<vmem>>, %arg2: memref<128x128xbf16, #tpu.memory_space<vmem>>, %arg3: memref<2x128x128xbf16, #tpu.memory_space<vmem>>, %arg4: memref<8x128xf32, #tpu.memory_space<vmem>>, %arg5: memref<16x1xf32, #tpu.memory_space<vmem>>, %arg6: memref<16x128xf32, #tpu.memory_space<vmem>>) attributes {dimension_semantics = [#tpu.dimension_semantics<parallel>], iteration_bounds = array<i64: 1>, scalar_prefetch = 0 : i64, scratch_operands = 1 : i64, tpu.core_type = #tpu.core_type<tc>, window_params = [{transform_indices = @transform_0, window_bounds = array<i64: 16, 22>}, {pipeline_mode = #tpu.pipeline_mode<synchronous>, transform_indices = @transform_1, window_bounds = array<i64: 128, 128>}, {pipeline_mode = #tpu.pipeline_mode<synchronous>, transform_indices = @transform_2, window_bounds = array<i64: 2, 128, 128>}, {pipeline_mode = #tpu.pipeline_mode<synchronous>, transform_indices = @transform_3, window_bounds = array<i64: 8, 128>}, {transform_indices = @transform_4, window_bounds = array<i64: 16, 1>}]} {
    %cst = arith.constant 0.000000e+00 : f32
    %0 = vector.broadcast %cst : f32 to vector<16x128xf32>
    %c0 = arith.constant 0 : index
    %c0_0 = arith.constant 0 : index
    %1 = vector.load %arg6[%c0, %c0_0] : memref<16x128xf32, #tpu.memory_space<vmem>>, vector<16x128xf32>
    tpu.vector_store %arg6[%c0, %c0_0], %0 {strides = array<i32>} : memref<16x128xf32, #tpu.memory_space<vmem>>, vector<16x128xf32>,
    %c0_1 = arith.constant 0 : index
    %c0_2 = arith.constant 0 : index
    %2 = vector.load %arg1[%c0_1, %c0_2] : memref<16x22xf32, #tpu.memory_space<vmem>>, vector<16x22xf32>
    %c0_3 = arith.constant 0 : index
    %c0_4 = arith.constant 0 : index
    %3 = vector.load %arg6[%c0_3, %c0_4] : memref<16x128xf32, #tpu.memory_space<vmem>>, vector<16x22xf32>
    tpu.vector_store %arg6[%c0_3, %c0_4], %2 {strides = array<i32>} : memref<16x128xf32, #tpu.memory_space<vmem>>, vector<16x22xf32>,
    %c0_5 = arith.constant 0 : index
    %c0_6 = arith.constant 0 : index
    %4 = vector.load %arg6[%c0_5, %c0_6] : memref<16x128xf32, #tpu.memory_space<vmem>>, vector<16x128xf32>
    %5 = arith.truncf %4 : vector<16x128xf32> to vector<16x128xbf16>
    %c0_7 = arith.constant 0 : index
    %c0_8 = arith.constant 0 : index
    %6 = vector.load %arg4[%c0_7, %c0_8] : memref<8x128xf32, #tpu.memory_space<vmem>>, vector<1x128xf32>
    %c1 = arith.constant 1 : index
    %c0_9 = arith.constant 0 : index
    %7 = vector.load %arg4[%c1, %c0_9] : memref<8x128xf32, #tpu.memory_space<vmem>>, vector<1x128xf32>
    %c2 = arith.constant 2 : index
    %c0_10 = arith.constant 0 : index
    %8 = vector.load %arg4[%c2, %c0_10] : memref<8x128xf32, #tpu.memory_space<vmem>>, vector<1x128xf32>
    %c3 = arith.constant 3 : index
    %c0_11 = arith.constant 0 : index
    %9 = vector.load %arg4[%c3, %c0_11] : memref<8x128xf32, #tpu.memory_space<vmem>>, vector<1x128xf32>
    %c0_12 = arith.constant 0 : index
    %c0_13 = arith.constant 0 : index
    %10 = vector.load %arg2[%c0_12, %c0_13] : memref<128x128xbf16, #tpu.memory_space<vmem>>, vector<128x128xbf16>
    %cst_14 = arith.constant dense<0.000000e+00> : vector<16x128xf32>
    %11 = tpu.matmul %5, %10, %cst_14 {dimension_numbers = #tpu.dot_dimension_numbers<[1], [0], [0], [1], [0, 0, 1, 1], [], []>} : vector<16x128xbf16>, vector<128x128xbf16>, vector<16x128xf32> -> vector<16x128xf32>
    %12 = vector.broadcast %6 : vector<1x128xf32> to vector<16x128xf32>
    %13 = arith.addf %11, %12 : vector<16x128xf32>
    %cst_15 = arith.constant 0.000000e+00 : f32
    %14 = vector.broadcast %cst_15 : f32 to vector<16x128xf32>
    %15 = arith.maximumf %13, %14 : vector<16x128xf32>
    %16 = arith.truncf %15 : vector<16x128xf32> to vector<16x128xbf16>
    %c0_16 = arith.constant 0 : index
    %c0_17 = arith.constant 0 : index
    %c0_18 = arith.constant 0 : index
    %17 = vector.load %arg3[%c0_16, %c0_17, %c0_18] : memref<2x128x128xbf16, #tpu.memory_space<vmem>>, vector<1x128x128xbf16>
    %18 = vector.shape_cast %17 : vector<1x128x128xbf16> to vector<128x128xbf16>
    %cst_19 = arith.constant dense<0.000000e+00> : vector<16x128xf32>
    %19 = tpu.matmul %16, %18, %cst_19 {dimension_numbers = #tpu.dot_dimension_numbers<[1], [0], [0], [1], [0, 0, 1, 1], [], []>} : vector<16x128xbf16>, vector<128x128xbf16>, vector<16x128xf32> -> vector<16x128xf32>
    %20 = vector.broadcast %7 : vector<1x128xf32> to vector<16x128xf32>
    %21 = arith.addf %19, %20 : vector<16x128xf32>
    %cst_20 = arith.constant 0.000000e+00 : f32
    %22 = vector.broadcast %cst_20 : f32 to vector<16x128xf32>
    %23 = arith.maximumf %21, %22 : vector<16x128xf32>
    %24 = arith.truncf %23 : vector<16x128xf32> to vector<16x128xbf16>
    %c1_21 = arith.constant 1 : index
    %c0_22 = arith.constant 0 : index
    %c0_23 = arith.constant 0 : index
    %25 = vector.load %arg3[%c1_21, %c0_22, %c0_23] : memref<2x128x128xbf16, #tpu.memory_space<vmem>>, vector<1x128x128xbf16>
    %26 = vector.shape_cast %25 : vector<1x128x128xbf16> to vector<128x128xbf16>
    %cst_24 = arith.constant dense<0.000000e+00> : vector<16x128xf32>
    %27 = tpu.matmul %24, %26, %cst_24 {dimension_numbers = #tpu.dot_dimension_numbers<[1], [0], [0], [1], [0, 0, 1, 1], [], []>} : vector<16x128xbf16>, vector<128x128xbf16>, vector<16x128xf32> -> vector<16x128xf32>
    %28 = vector.broadcast %8 : vector<1x128xf32> to vector<16x128xf32>
    %29 = arith.addf %27, %28 : vector<16x128xf32>
    %cst_25 = arith.constant 0.000000e+00 : f32
    %30 = vector.broadcast %cst_25 : f32 to vector<16x128xf32>
    %31 = arith.maximumf %29, %30 : vector<16x128xf32>
    %32 = vector.broadcast %9 : vector<1x128xf32> to vector<16x128xf32>
    %33 = arith.mulf %31, %32 : vector<16x128xf32>
    %cst_26 = arith.constant dense<0.000000e+00> : vector<16xf32>
    %34 = vector.multi_reduction <add>, %33, %cst_26 [1] : vector<16x128xf32> to vector<16xf32>
    %35 = vector.shape_cast %34 : vector<16xf32> to vector<16x1xf32>
    %c0_27 = arith.constant 0 : index
    %c0_28 = arith.constant 0 : index
    %36 = vector.load %arg5[%c0_27, %c0_28] : memref<16x1xf32, #tpu.memory_space<vmem>>, vector<16x1xf32>
    tpu.vector_store %arg5[%c0_27, %c0_28], %35 {strides = array<i32>} : memref<16x1xf32, #tpu.memory_space<vmem>>, vector<16x1xf32>,
    return
  }
  func.func @transform_0(%arg0: i32) -> (i32, i32) {
    %c0_i32 = arith.constant 0 : i32
    %c0_i32_0 = arith.constant 0 : i32
    return %arg0, %c0_i32 : i32, i32
  }
  func.func @transform_1(%arg0: i32) -> (i32, i32) {
    %c0_i32 = arith.constant 0 : i32
    %c0_i32_0 = arith.constant 0 : i32
    %c0_i32_1 = arith.constant 0 : i32
    return %c0_i32, %c0_i32_0 : i32, i32
  }
  func.func @transform_2(%arg0: i32) -> (i32, i32, i32) {
    %c0_i32 = arith.constant 0 : i32
    %c0_i32_0 = arith.constant 0 : i32
    %c0_i32_1 = arith.constant 0 : i32
    %c0_i32_2 = arith.constant 0 : i32
    return %c0_i32, %c0_i32_0, %c0_i32_1 : i32, i32, i32
  }
  func.func @transform_3(%arg0: i32) -> (i32, i32) {
    %c0_i32 = arith.constant 0 : i32
    %c0_i32_0 = arith.constant 0 : i32
    %c0_i32_1 = arith.constant 0 : i32
    return %c0_i32, %c0_i32_0 : i32, i32
  }
  func.func @transform_4(%arg0: i32) -> (i32, i32) {
    %c0_i32 = arith.constant 0 : i32
    %c0_i32_0 = arith.constant 0 : i32
    return %arg0, %c0_i32 : i32, i32
  }
}

</mosaic_0001>

<llo_original>
// kernel: soft_q_forward.1
$region0: #{soft_q_forward.1}
  #allocation0 [shape = 'u32[]', space=smem, size = 0x4, offset = 0x4, fixed_abs, tag = 'smem constant byte address 0x4 - core index']
  #allocation1 [shape = 'u32[144,128]{1,0:T(1,128)}', space=vmem, size = 0x12000, scoped, tag = 'internal scratch']
  #allocation2 [shape = 'f32[16,128]{1,0:T(8,128)}', space=vmem, size = 0x2000, scoped, tag = 'scratch operand']
  %s0 = inlined_call_operand.vmem [shape: f32[16,22], index: 0, kind: input, shape index: {}]
  %s1 = inlined_call_operand.vmem [shape: bf16[128,128], index: 1, kind: input, shape index: {}]
  %s2 = inlined_call_operand.vmem [shape: bf16[2,128,128], index: 2, kind: input, shape index: {}]
  %s3 = inlined_call_operand.vmem [shape: f32[8,128], index: 3, kind: input, shape index: {}]
  %s4 = inlined_call_operand.vmem [shape: f32[16,1], index: 4, kind: output, shape index: {}]
  %s5 = sld [smem:[#allocation0]]
  $region26: #{soft_q_forward.1} parent=0
    _
  %s7 = ssub.s32 1, %s5
  %s8 = scalar_select 0, %s7, %s5
  // Predicated region
  $region2: #{soft_q_forward.1} parent=0 // pred_check
    _
  $region3: #{soft_q_forward.1} parent=0 // pred_check_branch
    %10 = sbr.rel (0) target = $region5
  $region4: #{soft_q_forward.1} parent=0 // pred_region
    _
  $region5: #{soft_q_forward.1} parent=0 // pred_fallthru
    _
  // Predicated region
  $region6: #{soft_q_forward.1} parent=0 // pred_check
    _
  $region7: #{soft_q_forward.1} parent=0 // pred_check_branch
    %12 = sbr.rel (0) target = $region9
  $region8: #{soft_q_forward.1} parent=0 // pred_region
    _
  $region9: #{soft_q_forward.1} parent=0 // pred_fallthru
    _
  // Predicated region
  $region10: #{soft_q_forward.1} parent=0 // pred_check
    _
  $region11: #{soft_q_forward.1} parent=0 // pred_check_branch
    %14 = sbr.rel (0) target = $region13
  $region12: #{soft_q_forward.1} parent=0 // pred_region
    _
  $region13: #{soft_q_forward.1} parent=0 // pred_fallthru
    _
  // Predicated region
  $region14: #{soft_q_forward.1} parent=0 // pred_check
    _
  $region15: #{soft_q_forward.1} parent=0 // pred_check_branch
    %16 = sbr.rel (0) target = $region17
  $region16: #{soft_q_forward.1} parent=0 // pred_region
    _
  $region17: #{soft_q_forward.1} parent=0 // pred_fallthru
    _
  %18 = vst [vmem:[#allocation2] sm:$0xff] 0.0
  %19 = vst [vmem:[#allocation2 + $0x8] sm:$0xff] 0.0
  %v20 = vld [vmem:[%s0] sm:$0xff]
  %v21 = vld [vmem:[%s0 + $0x8] sm:$0xff]
  %vm22 = vcmask 179200
  %23 = vst.msk [vmem:[#allocation2] sm:$0xff] %vm22, %v20
  %24 = vst.msk [vmem:[#allocation2 + $0x8] sm:$0xff] %vm22, %v21
  %v25 = vld [vmem:[#allocation2] sm:$0xff]
  %v26 = vld [vmem:[#allocation2 + $0x8] sm:$0xff]
  %v27 = vpack.c.bf16 %v26, %v25
  %v28 = vld [vmem:[%s3] sm:$0x1]
  %v29 = vld [vmem:[%s3 + $0x1] sm:$0x1]
  %v30 = vld [vmem:[%s3 + $0x2] sm:$0x1]
  %v31 = vld [vmem:[%s3 + $0x3] sm:$0x1]
  %v32 = vld [vmem:[%s1] sm:$0xf]
  %v33 = vld [vmem:[%s1 + $0x4] sm:$0xf]
  %v34 = vld [vmem:[%s1 + $0x8] sm:$0xf]
  %v35 = vld [vmem:[%s1 + $0xc] sm:$0xf]
  %v36 = vld [vmem:[%s1 + $0x10] sm:$0xf]
  %v37 = vld [vmem:[%s1 + $0x14] sm:$0xf]
  %v38 = vld [vmem:[%s1 + $0x18] sm:$0xf]
  %v39 = vld [vmem:[%s1 + $0x1c] sm:$0xf]
  %v40 = vld [vmem:[%s1 + $0x20] sm:$0xf]
  %v41 = vld [vmem:[%s1 + $0x24] sm:$0xf]
  %v42 = vld [vmem:[%s1 + $0x28] sm:$0xf]
  %v43 = vld [vmem:[%s1 + $0x2c] sm:$0xf]
  %v44 = vld [vmem:[%s1 + $0x30] sm:$0xf]
  %v45 = vld [vmem:[%s1 + $0x34] sm:$0xf]
  %v46 = vld [vmem:[%s1 + $0x38] sm:$0xf]
  %v47 = vld [vmem:[%s1 + $0x3c] sm:$0xf]
  %v48 = vlaneseq
  %v49 = vshrl.u32 %v48, 7
  %v50 = vsub.s32 0, %v49
  %v51 = vrot.slane %v28, %v50
  %v68 = vunpack.c.l.b16 %v32
  %v69 = vunpack.c.l.b16 %v33
  %v70 = vunpack.c.l.b16 %v34
  %v71 = vunpack.c.l.b16 %v35
  %v72 = vunpack.c.l.b16 %v36
  %v73 = vunpack.c.l.b16 %v37
  %v74 = vunpack.c.l.b16 %v38
  %v75 = vunpack.c.l.b16 %v39
  %v76 = vunpack.c.l.b16 %v40
  %v77 = vunpack.c.l.b16 %v41
  %v78 = vunpack.c.l.b16 %v42
  %v79 = vunpack.c.l.b16 %v43
  %v80 = vunpack.c.l.b16 %v44
  %v81 = vunpack.c.l.b16 %v45
  %v82 = vunpack.c.l.b16 %v46
  %v83 = vunpack.c.l.b16 %v47
  %v84 = vpack.c.b16 %v69, %v68
  %v85 = vpack.c.b16 %v71, %v70
  %v86 = vpack.c.b16 %v73, %v72
  %v87 = vpack.c.b16 %v75, %v74
  %v88 = vpack.c.b16 %v77, %v76
  %v89 = vpack.c.b16 %v79, %v78
  %v90 = vpack.c.b16 %v81, %v80
  %v91 = vpack.c.b16 %v83, %v82
  %100 = vmatprep.subr.bf16.mxu0 0
  %101 = vmatpush1.bf16.msra.mxu0 %v84
  %102 = vmatprep.subr.bf16.mxu0 0
  %103 = vmatpush1.bf16.msra.mxu0 %v85
  %104 = vmatprep.subr.bf16.mxu0 0
  %105 = vmatpush1.bf16.msra.mxu0 %v86
  %106 = vmatprep.subr.bf16.mxu0 0
  %107 = vmatpush1.bf16.msra.mxu0 %v87
  %108 = vmatprep.subr.bf16.mxu0 0
  %109 = vmatpush1.bf16.msra.mxu0 %v88
  %110 = vmatprep.subr.bf16.mxu0 0
  %111 = vmatpush1.bf16.msra.mxu0 %v89
  %112 = vmatprep.subr.bf16.mxu0 0
  %113 = vmatpush1.bf16.msra.mxu0 %v90
  %114 = vmatprep.subr.bf16.mxu0 0
  %115 = vmatpush1.bf16.msra.mxu0 %v91
  %116 = vmatprep.subr.bf16.mxu0 0
  %117 = vmatpush1.bf16.msra.mxu0 0
  %118 = vmatprep.subr.bf16.mxu0 0
  %119 = vmatpush1.bf16.msra.mxu0 0
  %120 = vmatprep.subr.bf16.mxu0 0
  %121 = vmatpush1.bf16.msra.mxu0 0
  %122 = vmatprep.subr.bf16.mxu0 0
  %123 = vmatpush1.bf16.msra.mxu0 0
  %124 = vmatprep.subr.bf16.mxu0 0
  %125 = vmatpush1.bf16.msra.mxu0 0
  %126 = vmatprep.subr.bf16.mxu0 0
  %127 = vmatpush1.bf16.msra.mxu0 0
  %128 = vmatprep.subr.bf16.mxu0 0
  %129 = vmatpush1.bf16.msra.mxu0 0
  %130 = vmatprep.subr.bf16.mxu0 0
  %131 = vmatpush1.bf16.msra.mxu0 0
  %132 = vmatprep.mubr.bf16.mxu0 0
  %133 = vmatmul.mubr.bf16.gmra.mrb[0].mxu0 %v27
  %v134 = vpop.f32.mrb[0].mxu0
  %v135 = vadd.f32 %v51, %v134
  %v136 = vpop.f32.mrb[0].mxu0
  %v137 = vpop.f32.mrb[0].mxu0
  %v138 = vadd.f32 %v51, %v137
  %v139 = vpop.f32.mrb[0].mxu0
  %140 = vdwg.mxu0
  %v141 = vmax.f32 %v135, 0.0
  %v142 = vmax.f32 %v138, 0.0
  %v143 = vpack.c.bf16 %v142, %v141
  %v144 = vld [vmem:[%s2] sm:$0xf]
  %v145 = vld [vmem:[%s2 + $0x4] sm:$0xf]
  %v146 = vld [vmem:[%s2 + $0x8] sm:$0xf]
  %v147 = vld [vmem:[%s2 + $0xc] sm:$0xf]
  %v148 = vld [vmem:[%s2 + $0x10] sm:$0xf]
  %v149 = vld [vmem:[%s2 + $0x14] sm:$0xf]
  %v150 = vld [vmem:[%s2 + $0x18] sm:$0xf]
  %v151 = vld [vmem:[%s2 + $0x1c] sm:$0xf]
  %v152 = vld [vmem:[%s2 + $0x20] sm:$0xf]
  %v153 = vld [vmem:[%s2 + $0x24] sm:$0xf]
  %v154 = vld [vmem:[%s2 + $0x28] sm:$0xf]
  %v155 = vld [vmem:[%s2 + $0x2c] sm:$0xf]
  %v156 = vld [vmem:[%s2 + $0x30] sm:$0xf]
  %v157 = vld [vmem:[%s2 + $0x34] sm:$0xf]
  %v158 = vld [vmem:[%s2 + $0x38] sm:$0xf]
  %v159 = vld [vmem:[%s2 + $0x3c] sm:$0xf]
  %v160 = vlaneseq
  %v161 = vshrl.u32 %v160, 7
  %v162 = vsub.s32 0, %v161
  %v163 = vrot.slane %v29, %v162
  %v180 = vunpack.c.l.b16 %v144
  %v181 = vunpack.c.l.b16 %v145
  %v182 = vunpack.c.l.b16 %v146
  %v183 = vunpack.c.l.b16 %v147
  %v184 = vunpack.c.l.b16 %v148
  %v185 = vunpack.c.l.b16 %v149
  %v186 = vunpack.c.l.b16 %v150
  %v187 = vunpack.c.l.b16 %v151
  %v188 = vunpack.c.l.b16 %v152
  %v189 = vunpack.c.l.b16 %v153
  %v190 = vunpack.c.l.b16 %v154
  %v191 = vunpack.c.l.b16 %v155
  %v192 = vunpack.c.l.b16 %v156
  %v193 = vunpack.c.l.b16 %v157
  %v194 = vunpack.c.l.b16 %v158
  %v195 = vunpack.c.l.b16 %v159
  %v196 = vpack.c.b16 %v181, %v180
  %v197 = vpack.c.b16 %v183, %v182
  %v198 = vpack.c.b16 %v185, %v184
  %v199 = vpack.c.b16 %v187, %v186
  %v200 = vpack.c.b16 %v189, %v188
  %v201 = vpack.c.b16 %v191, %v190
  %v202 = vpack.c.b16 %v193, %v192
  %v203 = vpack.c.b16 %v195, %v194
  %212 = vmatprep.subr.bf16.mxu0 0
  %213 = vmatpush1.bf16.msra.mxu0 %v196
  %214 = vmatprep.subr.bf16.mxu0 0
  %215 = vmatpush1.bf16.msra.mxu0 %v197
  %216 = vmatprep.subr.bf16.mxu0 0
  %217 = vmatpush1.bf16.msra.mxu0 %v198
  %218 = vmatprep.subr.bf16.mxu0 0
  %219 = vmatpush1.bf16.msra.mxu0 %v199
  %220 = vmatprep.subr.bf16.mxu0 0
  %221 = vmatpush1.bf16.msra.mxu0 %v200
  %222 = vmatprep.subr.bf16.mxu0 0
  %223 = vmatpush1.bf16.msra.mxu0 %v201
  %224 = vmatprep.subr.bf16.mxu0 0
  %225 = vmatpush1.bf16.msra.mxu0 %v202
  %226 = vmatprep.subr.bf16.mxu0 0
  %227 = vmatpush1.bf16.msra.mxu0 %v203
  %228 = vmatprep.subr.bf16.mxu0 0
  %229 = vmatpush1.bf16.msra.mxu0 0
  %230 = vmatprep.subr.bf16.mxu0 0
  %231 = vmatpush1.bf16.msra.mxu0 0
  %232 = vmatprep.subr.bf16.mxu0 0
  %233 = vmatpush1.bf16.msra.mxu0 0
  %234 = vmatprep.subr.bf16.mxu0 0
  %235 = vmatpush1.bf16.msra.mxu0 0
  %236 = vmatprep.subr.bf16.mxu0 0
  %237 = vmatpush1.bf16.msra.mxu0 0
  %238 = vmatprep.subr.bf16.mxu0 0
  %239 = vmatpush1.bf16.msra.mxu0 0
  %240 = vmatprep.subr.bf16.mxu0 0
  %241 = vmatpush1.bf16.msra.mxu0 0
  %242 = vmatprep.subr.bf16.mxu0 0
  %243 = vmatpush1.bf16.msra.mxu0 0
  %244 = vmatprep.mubr.bf16.mxu0 0
  %245 = vmatmul.mubr.bf16.gmra.mrb[0].mxu0 %v143
  %v246 = vpop.f32.mrb[0].mxu0
  %v247 = vadd.f32 %v163, %v246
  %v248 = vpop.f32.mrb[0].mxu0
  %v249 = vpop.f32.mrb[0].mxu0
  %v250 = vadd.f32 %v163, %v249
  %v251 = vpop.f32.mrb[0].mxu0
  %252 = vdwg.mxu0
  %v253 = vmax.f32 %v247, 0.0
  %v254 = vmax.f32 %v250, 0.0
  %v255 = vpack.c.bf16 %v254, %v253
  %s256 = scalar_lea.vmem %s2, 64
  %v257 = vld [vmem:[%s256] sm:$0xf]
  %v258 = vld [vmem:[%s256 + $0x4] sm:$0xf]
  %v259 = vld [vmem:[%s256 + $0x8] sm:$0xf]
  %v260 = vld [vmem:[%s256 + $0xc] sm:$0xf]
  %v261 = vld [vmem:[%s256 + $0x10] sm:$0xf]
  %v262 = vld [vmem:[%s256 + $0x14] sm:$0xf]
  %v263 = vld [vmem:[%s256 + $0x18] sm:$0xf]
  %v264 = vld [vmem:[%s256 + $0x1c] sm:$0xf]
  %v265 = vld [vmem:[%s256 + $0x20] sm:$0xf]
  %v266 = vld [vmem:[%s256 + $0x24] sm:$0xf]
  %v267 = vld [vmem:[%s256 + $0x28] sm:$0xf]
  %v268 = vld [vmem:[%s256 + $0x2c] sm:$0xf]
  %v269 = vld [vmem:[%s256 + $0x30] sm:$0xf]
  %v270 = vld [vmem:[%s256 + $0x34] sm:$0xf]
  %v271 = vld [vmem:[%s256 + $0x38] sm:$0xf]
  %v272 = vld [vmem:[%s256 + $0x3c] sm:$0xf]
  %v273 = vlaneseq
  %v274 = vshrl.u32 %v273, 7
  %v275 = vsub.s32 0, %v274
  %v276 = vrot.slane %v30, %v275
  %v293 = vunpack.c.l.b16 %v257
  %v294 = vunpack.c.l.b16 %v258
  %v295 = vunpack.c.l.b16 %v259
  %v296 = vunpack.c.l.b16 %v260
  %v297 = vunpack.c.l.b16 %v261
  %v298 = vunpack.c.l.b16 %v262
  %v299 = vunpack.c.l.b16 %v263
  %v300 = vunpack.c.l.b16 %v264
  %v301 = vunpack.c.l.b16 %v265
  %v302 = vunpack.c.l.b16 %v266
  %v303 = vunpack.c.l.b16 %v267
  %v304 = vunpack.c.l.b16 %v268
  %v305 = vunpack.c.l.b16 %v269
  %v306 = vunpack.c.l.b16 %v270
  %v307 = vunpack.c.l.b16 %v271
  %v308 = vunpack.c.l.b16 %v272
  %v309 = vpack.c.b16 %v294, %v293
  %v310 = vpack.c.b16 %v296, %v295
  %v311 = vpack.c.b16 %v298, %v297
  %v312 = vpack.c.b16 %v300, %v299
  %v313 = vpack.c.b16 %v302, %v301
  %v314 = vpack.c.b16 %v304, %v303
  %v315 = vpack.c.b16 %v306, %v305
  %v316 = vpack.c.b16 %v308, %v307
  %325 = vmatprep.subr.bf16.mxu0 0
  %326 = vmatpush1.bf16.msra.mxu0 %v309
  %327 = vmatprep.subr.bf16.mxu0 0
  %328 = vmatpush1.bf16.msra.mxu0 %v310
  %329 = vmatprep.subr.bf16.mxu0 0
  %330 = vmatpush1.bf16.msra.mxu0 %v311
  %331 = vmatprep.subr.bf16.mxu0 0
  %332 = vmatpush1.bf16.msra.mxu0 %v312
  %333 = vmatprep.subr.bf16.mxu0 0
  %334 = vmatpush1.bf16.msra.mxu0 %v313
  %335 = vmatprep.subr.bf16.mxu0 0
  %336 = vmatpush1.bf16.msra.mxu0 %v314
  %337 = vmatprep.subr.bf16.mxu0 0
  %338 = vmatpush1.bf16.msra.mxu0 %v315
  %339 = vmatprep.subr.bf16.mxu0 0
  %340 = vmatpush1.bf16.msra.mxu0 %v316
  %341 = vmatprep.subr.bf16.mxu0 0
  %342 = vmatpush1.bf16.msra.mxu0 0
  %343 = vmatprep.subr.bf16.mxu0 0
  %344 = vmatpush1.bf16.msra.mxu0 0
  %345 = vmatprep.subr.bf16.mxu0 0
  %346 = vmatpush1.bf16.msra.mxu0 0
  %347 = vmatprep.subr.bf16.mxu0 0
  %348 = vmatpush1.bf16.msra.mxu0 0
  %349 = vmatprep.subr.bf16.mxu0 0
  %350 = vmatpush1.bf16.msra.mxu0 0
  %351 = vmatprep.subr.bf16.mxu0 0
  %352 = vmatpush1.bf16.msra.mxu0 0
  %353 = vmatprep.subr.bf16.mxu0 0
  %354 = vmatpush1.bf16.msra.mxu0 0
  %355 = vmatprep.subr.bf16.mxu0 0
  %356 = vmatpush1.bf16.msra.mxu0 0
  %357 = vmatprep.mubr.bf16.mxu0 0
  %358 = vmatmul.mubr.bf16.gmra.mrb[0].mxu0 %v255
  %v359 = vpop.f32.mrb[0].mxu0
  %v360 = vadd.f32 %v276, %v359
  %v361 = vpop.f32.mrb[0].mxu0
  %v362 = vpop.f32.mrb[0].mxu0
  %v363 = vadd.f32 %v276, %v362
  %v364 = vpop.f32.mrb[0].mxu0
  %365 = vdwg.mxu0
  %v366 = vmax.f32 %v360, 0.0
  %v367 = vmax.f32 %v363, 0.0
  %v368 = vlaneseq
  %v369 = vshrl.u32 %v368, 7
  %v370 = vsub.s32 0, %v369
  %v371 = vrot.slane %v31, %v370
  %v372 = vmul.f32 %v366, %v371
  %v373 = vmul.f32 %v367, %v371
  %374 = vadd.xlane.f32.xlu0 %v372
  %v375 = vpop.xlane.xlu0 %374
  %376 = vadd.xlane.f32.xlu0 %v373
  %v377 = vpop.xlane.xlu0 %376
  %vm378 = vcmask 7168
  %379 = vst.msk [vmem:[%s4] sm:$0xff] %vm378, %v375
  %380 = vst.msk [vmem:[%s4 + $0x8] sm:$0xff] %vm378, %v377
  // Predicated region
  $region18: #{soft_q_forward.1} parent=0 // pred_check
    _
  $region19: #{soft_q_forward.1} parent=0 // pred_check_branch
    %382 = sbr.rel (0) target = $region21
  $region20: #{soft_q_forward.1} parent=0 // pred_region
    _
  $region21: #{soft_q_forward.1} parent=0 // pred_fallthru
    _
  // Predicated region
  $region22: #{soft_q_forward.1} parent=0 // pred_check
    _
  $region23: #{soft_q_forward.1} parent=0 // pred_check_branch
    %384 = sbr.rel (0) target = $region25
  $region24: #{soft_q_forward.1} parent=0 // pred_region
    _
  $region25: #{soft_q_forward.1} parent=0 // pred_fallthru
    _

</llo_original>
